<compile_context>
chip_gen: v5e
topology: v5e:2x2
jax: 0.10.0
libtpu: 0.0.40
codegen_flags: <defaults>
</compile_context>

<pallas_src>
import math

import jax
import jax.numpy as jnp
from jax.experimental import pallas as pl
from jax.experimental.pallas import tpu as pltpu

IN_DIM = 2
OUT_DIMS = (512, 64, 64, 32, 16)       # linear5, linear4, linear3, linear2, linear1
BIG = OUT_DIMS[0]                      # 512  (lane-dense, multiple of 128)
SMALL = sum(OUT_DIMS[1:])              # 176  (full-extent last dim, no HBM pad)
MIN_TILE_BS = 512                      # below this: single full-extent block
MAX_TILE_BS = 1024                     # rows per grid step for large batches


def _anet_fused_kernel(x_ref, w5_ref, b5_ref, ws_ref, bs_ref, o5_ref, os_ref):
    """x:(bm,2)  w5:(2,512) b5:(1,512)  ws:(2,176) bs:(1,176)  o5:(bm,512) os:(bm,176)."""
    x0 = x_ref[:, 0:1]                                  # (bm, 1)
    x1 = x_ref[:, 1:2]                                  # (bm, 1)

    # K=2 contraction as VPU FMAs (lane broadcast of w rows, no MXU).
    y5 = x0 * w5_ref[0:1, :] + x1 * w5_ref[1:2, :] + b5_ref[...]
    o5_ref[...] = jnp.maximum(y5, 0.0).astype(o5_ref.dtype)

    ys = x0 * ws_ref[0:1, :] + x1 * ws_ref[1:2, :] + bs_ref[...]
    os_ref[...] = jnp.maximum(ys, 0.0).astype(os_ref.dtype)


def _fuse_params(params):
    """Split params into the big head (512) and the concatenated small heads (176)."""
    w5, b5 = params[0]                                            # (2,512), (1,512)
    ws = jnp.concatenate([w for w, _ in params[1:]], axis=1)      # (2,176)
    bs = jnp.concatenate([b for _, b in params[1:]], axis=1)      # (1,176)
    return (w5.astype(jnp.float32), b5.astype(jnp.float32),
            ws.astype(jnp.float32), bs.astype(jnp.float32))


def _choose_tiling(bs):
    """Pick (bm, bs_pad).  Small batches: one full-extent block (legal for any bs).
    Large batches: >=2 grid steps (megacore), tiles sublane-aligned, <= MAX_TILE_BS."""
    if bs <= MIN_TILE_BS:
        return bs, bs
    n_tiles = max(2, -(-bs // MAX_TILE_BS))
    bm = -(-bs // n_tiles)
    bm = ((bm + 7) // 8) * 8                      # sublane-aligned when tiled
    bs_pad = bm * (-(-bs // bm))
    return bm, bs_pad


def anet_forward(x, params):
    """x: (bs, ...) with prod of trailing dims == 2 (matches x.view(bs, 2))."""
    bs = x.shape[0]
    x2 = x.reshape(bs, IN_DIM).astype(jnp.float32)
    w5, b5, ws, bsm = _fuse_params(params)

    bm, bs_pad = _choose_tiling(bs)
    if bs_pad != bs:
        x2 = jnp.pad(x2, ((0, bs_pad - bs), (0, 0)))
    grid = (bs_pad // bm,)

    total_out = BIG + SMALL  # 688
    cost = pl.CostEstimate(
        flops=5 * bs_pad * total_out,                        # 2 mul + 2 add + relu
        transcendentals=0,
        bytes_accessed=(bs_pad * IN_DIM * 4                  # x in
                        + bs_pad * total_out * 4             # outputs
                        + (IN_DIM + 1) * total_out * 4),     # params
    )

    o5, o_small = pl.pallas_call(
        _anet_fused_kernel,
        out_shape=(jax.ShapeDtypeStruct((bs_pad, BIG), jnp.float32),
                   jax.ShapeDtypeStruct((bs_pad, SMALL), jnp.float32)),
        grid=grid,
        in_specs=[
            pl.BlockSpec((bm, IN_DIM), lambda i: (i, 0)),    # x tile
            pl.BlockSpec((IN_DIM, BIG), lambda i: (0, 0)),   # W5  (resident)
            pl.BlockSpec((1, BIG), lambda i: (0, 0)),        # b5  (resident)
            pl.BlockSpec((IN_DIM, SMALL), lambda i: (0, 0)), # W small (resident)
            pl.BlockSpec((1, SMALL), lambda i: (0, 0)),      # b small (resident)
        ],
        out_specs=(pl.BlockSpec((bm, BIG), lambda i: (i, 0)),
                   pl.BlockSpec((bm, SMALL), lambda i: (i, 0))),
        compiler_params=pltpu.CompilerParams(
            dimension_semantics=("parallel",),
            vmem_limit_bytes=32 * 1024 * 1024),
        cost_estimate=cost,
    )(x2, w5, b5, ws, bsm)

    # a5 is returned directly from its own lane-dense output (no slice copy).
    a5 = o5[:bs] if bs_pad != bs else o5
    small = o_small[:bs] if bs_pad != bs else o_small

    # Slice only the small 176-lane slab back into the 4 remaining heads.
    o1 = OUT_DIMS[1]                    # 64
    o2 = o1 + OUT_DIMS[2]               # 128
    o3 = o2 + OUT_DIMS[3]               # 160
    o4 = o3 + OUT_DIMS[4]               # 176
    a4 = small[:, :o1].reshape(bs, 64, 1, 1)
    a3 = small[:, o1:o2].reshape(bs, 64, 1, 1)
    a2 = small[:, o2:o3].reshape(bs, 32, 1, 1)
    a1 = small[:, o3:o4].reshape(bs, 16, 1, 1)
    return a5.reshape(bs, 512), a4, a3, a2, a1


def init_params(key):
    """Deterministic init mimicking nn.Linear defaults (uniform ±1/sqrt(fan_in)).

    Weights stored transposed relative to PyTorch: shape (in, out) so the
    kernel computes x @ W.  Biases stored as (1, out) for lane broadcast.
    """
    params = []
    bound = 1.0 / math.sqrt(IN_DIM)
    for n in OUT_DIMS:
        key, kw, kb = jax.random.split(key, 3)
        w = jax.random.uniform(kw, (IN_DIM, n), jnp.float32, -bound, bound)
        b = jax.random.uniform(kb, (1, n), jnp.float32, -bound, bound)
        params.append((w, b))
    return params


def _reference(x, params):
    bs = x.shape[0]
    x2 = x.reshape(bs, IN_DIM).astype(jnp.float32)
    outs = [jnp.maximum(x2 @ w + b, 0.0) for w, b in params]
    a5, a4, a3, a2, a1 = outs
    return (a5.reshape(bs, 512), a4.reshape(bs, 64, 1, 1),
            a3.reshape(bs, 64, 1, 1), a2.reshape(bs, 32, 1, 1),
            a1.reshape(bs, 16, 1, 1))


if __name__ == "__main__":
    key = jax.random.PRNGKey(0)
    key, kx = jax.random.split(key)

    bs = 2
    x = jax.random.normal(kx, (bs, IN_DIM), jnp.float32)

    params = init_params(key)

    outs = anet_forward(x, params)
    outs = jax.block_until_ready(outs)

    refs = _reference(x, params)
    expected_shapes = [(bs, 512), (bs, 64, 1, 1), (bs, 64, 1, 1),
                       (bs, 32, 1, 1), (bs, 16, 1, 1)]
    for o, r, s in zip(outs, refs, expected_shapes):
        assert o.shape == tuple(s), (o.shape, s)
        assert jnp.allclose(o, r, atol=1e-5, rtol=1e-5), "mismatch vs reference"

    print("KERNEL_OK")
</pallas_src>

<mosaic_0001>
module attributes {stable_mosaic.version = 11 : i64} {
  func.func @_anet_fused_kernel(%arg0: i32, %arg1: memref<2x2xf32, #tpu.memory_space<vmem>>, %arg2: memref<2x512xf32, #tpu.memory_space<vmem>>, %arg3: memref<1x512xf32, #tpu.memory_space<vmem>>, %arg4: memref<2x176xf32, #tpu.memory_space<vmem>>, %arg5: memref<1x176xf32, #tpu.memory_space<vmem>>, %arg6: memref<2x512xf32, #tpu.memory_space<vmem>>, %arg7: memref<2x176xf32, #tpu.memory_space<vmem>>) attributes {dimension_semantics = [#tpu.dimension_semantics<parallel>], iteration_bounds = array<i64: 1>, scalar_prefetch = 0 : i64, scratch_operands = 0 : i64, tpu.core_type = #tpu.core_type<tc>, window_params = [{transform_indices = @transform_0, window_bounds = array<i64: 2, 2>}, {pipeline_mode = #tpu.pipeline_mode<synchronous>, transform_indices = @transform_1, window_bounds = array<i64: 2, 512>}, {pipeline_mode = #tpu.pipeline_mode<synchronous>, transform_indices = @transform_2, window_bounds = array<i64: 1, 512>}, {pipeline_mode = #tpu.pipeline_mode<synchronous>, transform_indices = @transform_3, window_bounds = array<i64: 2, 176>}, {pipeline_mode = #tpu.pipeline_mode<synchronous>, transform_indices = @transform_4, window_bounds = array<i64: 1, 176>}, {transform_indices = @transform_5, window_bounds = array<i64: 2, 512>}, {transform_indices = @transform_6, window_bounds = array<i64: 2, 176>}]} {
    %c0 = arith.constant 0 : index
    %c0_0 = arith.constant 0 : index
    %0 = vector.load %arg1[%c0, %c0_0] : memref<2x2xf32, #tpu.memory_space<vmem>>, vector<2x1xf32>
    %c0_1 = arith.constant 0 : index
    %c1 = arith.constant 1 : index
    %1 = vector.load %arg1[%c0_1, %c1] : memref<2x2xf32, #tpu.memory_space<vmem>>, vector<2x1xf32>
    %c0_2 = arith.constant 0 : index
    %c0_3 = arith.constant 0 : index
    %2 = vector.load %arg2[%c0_2, %c0_3] : memref<2x512xf32, #tpu.memory_space<vmem>>, vector<1x512xf32>
    %3 = vector.broadcast %0 : vector<2x1xf32> to vector<2x512xf32>
    %4 = vector.broadcast %2 : vector<1x512xf32> to vector<2x512xf32>
    %5 = arith.mulf %3, %4 : vector<2x512xf32>
    %c1_4 = arith.constant 1 : index
    %c0_5 = arith.constant 0 : index
    %6 = vector.load %arg2[%c1_4, %c0_5] : memref<2x512xf32, #tpu.memory_space<vmem>>, vector<1x512xf32>
    %7 = vector.broadcast %1 : vector<2x1xf32> to vector<2x512xf32>
    %8 = vector.broadcast %6 : vector<1x512xf32> to vector<2x512xf32>
    %9 = arith.mulf %7, %8 : vector<2x512xf32>
    %10 = arith.addf %5, %9 : vector<2x512xf32>
    %c0_6 = arith.constant 0 : index
    %c0_7 = arith.constant 0 : index
    %11 = vector.load %arg3[%c0_6, %c0_7] : memref<1x512xf32, #tpu.memory_space<vmem>>, vector<1x512xf32>
    %12 = vector.broadcast %11 : vector<1x512xf32> to vector<2x512xf32>
    %13 = arith.addf %10, %12 : vector<2x512xf32>
    %cst = arith.constant 0.000000e+00 : f32
    %14 = vector.broadcast %cst : f32 to vector<2x512xf32>
    %15 = arith.maximumf %13, %14 : vector<2x512xf32>
    %c0_8 = arith.constant 0 : index
    %c0_9 = arith.constant 0 : index
    %16 = vector.load %arg6[%c0_8, %c0_9] : memref<2x512xf32, #tpu.memory_space<vmem>>, vector<2x512xf32>
    tpu.vector_store %arg6[%c0_8, %c0_9], %15 {strides = array<i32>} : memref<2x512xf32, #tpu.memory_space<vmem>>, vector<2x512xf32>,
    %c0_10 = arith.constant 0 : index
    %c0_11 = arith.constant 0 : index
    %17 = vector.load %arg4[%c0_10, %c0_11] : memref<2x176xf32, #tpu.memory_space<vmem>>, vector<1x176xf32>
    %18 = vector.broadcast %0 : vector<2x1xf32> to vector<2x176xf32>
    %19 = vector.broadcast %17 : vector<1x176xf32> to vector<2x176xf32>
    %20 = arith.mulf %18, %19 : vector<2x176xf32>
    %c1_12 = arith.constant 1 : index
    %c0_13 = arith.constant 0 : index
    %21 = vector.load %arg4[%c1_12, %c0_13] : memref<2x176xf32, #tpu.memory_space<vmem>>, vector<1x176xf32>
    %22 = vector.broadcast %1 : vector<2x1xf32> to vector<2x176xf32>
    %23 = vector.broadcast %21 : vector<1x176xf32> to vector<2x176xf32>
    %24 = arith.mulf %22, %23 : vector<2x176xf32>
    %25 = arith.addf %20, %24 : vector<2x176xf32>
    %c0_14 = arith.constant 0 : index
    %c0_15 = arith.constant 0 : index
    %26 = vector.load %arg5[%c0_14, %c0_15] : memref<1x176xf32, #tpu.memory_space<vmem>>, vector<1x176xf32>
    %27 = vector.broadcast %26 : vector<1x176xf32> to vector<2x176xf32>
    %28 = arith.addf %25, %27 : vector<2x176xf32>
    %cst_16 = arith.constant 0.000000e+00 : f32
    %29 = vector.broadcast %cst_16 : f32 to vector<2x176xf32>
    %30 = arith.maximumf %28, %29 : vector<2x176xf32>
    %c0_17 = arith.constant 0 : index
    %c0_18 = arith.constant 0 : index
    %31 = vector.load %arg7[%c0_17, %c0_18] : memref<2x176xf32, #tpu.memory_space<vmem>>, vector<2x176xf32>
    tpu.vector_store %arg7[%c0_17, %c0_18], %30 {strides = array<i32>} : memref<2x176xf32, #tpu.memory_space<vmem>>, vector<2x176xf32>,
    return
  }
  func.func @transform_0(%arg0: i32) -> (i32, i32) {
    %c0_i32 = arith.constant 0 : i32
    %c0_i32_0 = arith.constant 0 : i32
    return %arg0, %c0_i32 : i32, i32
  }
  func.func @transform_1(%arg0: i32) -> (i32, i32) {
    %c0_i32 = arith.constant 0 : i32
    %c0_i32_0 = arith.constant 0 : i32
    %c0_i32_1 = arith.constant 0 : i32
    return %c0_i32, %c0_i32_0 : i32, i32
  }
  func.func @transform_2(%arg0: i32) -> (i32, i32) {
    %c0_i32 = arith.constant 0 : i32
    %c0_i32_0 = arith.constant 0 : i32
    %c0_i32_1 = arith.constant 0 : i32
    return %c0_i32, %c0_i32_0 : i32, i32
  }
  func.func @transform_3(%arg0: i32) -> (i32, i32) {
    %c0_i32 = arith.constant 0 : i32
    %c0_i32_0 = arith.constant 0 : i32
    %c0_i32_1 = arith.constant 0 : i32
    return %c0_i32, %c0_i32_0 : i32, i32
  }
  func.func @transform_4(%arg0: i32) -> (i32, i32) {
    %c0_i32 = arith.constant 0 : i32
    %c0_i32_0 = arith.constant 0 : i32
    %c0_i32_1 = arith.constant 0 : i32
    return %c0_i32, %c0_i32_0 : i32, i32
  }
  func.func @transform_5(%arg0: i32) -> (i32, i32) {
    %c0_i32 = arith.constant 0 : i32
    %c0_i32_0 = arith.constant 0 : i32
    return %arg0, %c0_i32 : i32, i32
  }
  func.func @transform_6(%arg0: i32) -> (i32, i32) {
    %c0_i32 = arith.constant 0 : i32
    %c0_i32_0 = arith.constant 0 : i32
    return %arg0, %c0_i32 : i32, i32
  }
}

</mosaic_0001>

<llo_original>
// kernel: tpu_custom_call.1
$region0: #{tpu_custom_call.1}
  #allocation0 [shape = 'u32[]', space=smem, size = 0x4, offset = 0x4, fixed_abs, tag = 'smem constant byte address 0x4 - core index']
  #allocation1 [shape = 'u32[72,128]{1,0:T(1,128)}', space=vmem, size = 0x9000, scoped, tag = 'internal scratch']
  %s0 = inlined_call_operand.hbm [shape: f32[2,2], index: 0, kind: input, shape index: {}]
  %s1 = inlined_call_operand.hbm [shape: f32[2,512], index: 1, kind: input, shape index: {}]
  %s2 = inlined_call_operand.hbm [shape: f32[1,512], index: 2, kind: input, shape index: {}]
  %s3 = inlined_call_operand.hbm [shape: f32[2,176], index: 3, kind: input, shape index: {}]
  %s4 = inlined_call_operand.vmem [shape: f32[1,176], index: 4, kind: input, shape index: {}]
  %s5 = inlined_call_operand.hbm [shape: f32[2,512], index: 5, kind: output, shape index: {0}]
  %s6 = inlined_call_operand.hbm [shape: f32[2,176], index: 6, kind: output, shape index: {1}]
  %7 = xla_tuple %s5, %s6
  %s8 = sld [smem:[#allocation0]]
  $region54: #{tpu_custom_call.1} parent=0
    _
  %s10 = ssub.s32 1, %s8
  %s11 = scalar_select 0, %s10, %s8
  $region1: #{tpu_custom_call.1} parent=0
    #allocation2 [shape = 'u8[1024]{0}', space=vmem, size = 0x400, scoped, tag = 'input window, operand 0, single buffered']
    #allocation3 [shape = 's32[1]{0}', space=sflag, size = 0x4, scoped, tag = 'scoped memory for tpu_custom_call.1']
    #allocation4 [shape = 's32[1]{0}', space=sflag, size = 0x4, scoped, tag = 'scoped memory for tpu_custom_call.1']
    #allocation5 [shape = 'u8[4096]{0}', space=vmem, size = 0x1000, scoped, tag = 'input window, operand 1, single buffered']
    #allocation6 [shape = 's32[1]{0}', space=sflag, size = 0x4, scoped, tag = 'scoped memory for tpu_custom_call.1']
    #allocation7 [shape = 'u8[2048]{0}', space=vmem, size = 0x800, scoped, tag = 'input window, operand 2, single buffered']
    #allocation8 [shape = 'u8[2048]{0}', space=vmem, size = 0x800, scoped, tag = 'input window, operand 3, single buffered']
    #allocation9 [shape = 's32[1]{0}', space=sflag, size = 0x4, scoped, tag = 'scoped memory for tpu_custom_call.1']
    #allocation10 [shape = 'u8[4096]{0}', space=vmem, size = 0x1000, scoped, tag = 'output window, operand 0, single buffered']
    #allocation11 [shape = 'u8[2048]{0}', space=vmem, size = 0x800, scoped, tag = 'output window, operand 1, single buffered']
    #allocation12 [shape = 's32[1]{0}', space=sflag, size = 0x4, scoped, tag = 'scoped memory for tpu_custom_call.1']
    %12 = vsyncpa [#allocation3], 0
    %13 = vsyncpa [#allocation6], 0
    %14 = vsyncpa [#allocation9], 0
    %15 = vsyncpa [#allocation4], 0
    %16 = vsyncpa [#allocation12], 0
    // Predicated region
    $region2: #{tpu_custom_call.1} parent=1 // pred_check
      _
    $region3: #{tpu_custom_call.1} parent=1 // pred_check_branch
      %18 = sbr.rel (0) target = $region5
    $region4: #{tpu_custom_call.1} parent=1 // pred_region
      %20 = vsyncadd [#allocation3], 0
      %s22 = sshll.u32 %s0, 4
      %s23 = int_to_ptr.hbm [resolvable:$true] %s22
      %s24 = sshll.u32 [#allocation2], 4
      %s25 = int_to_ptr.vmem [resolvable:$true] %s24
      %27 = dma.hbm_to_vmem [thread:$0]  %s23, 32, %s25, [#allocation3]
    $region5: #{tpu_custom_call.1} parent=1 // pred_fallthru
      _
    // Predicated region
    $region6: #{tpu_custom_call.1} parent=1 // pred_check
      _
    $region7: #{tpu_custom_call.1} parent=1 // pred_check_branch
      %29 = sbr.rel (0) target = $region9
    $region8: #{tpu_custom_call.1} parent=1 // pred_region
      %31 = vsyncadd [#allocation6], 0
      %s33 = sshll.u32 %s1, 4
      %s34 = int_to_ptr.hbm [resolvable:$true] %s33
      %s35 = sshll.u32 [#allocation5], 4
      %s36 = int_to_ptr.vmem [resolvable:$true] %s35
      %38 = dma.hbm_to_vmem [thread:$0]  %s34, 128, %s36, [#allocation6]
    $region9: #{tpu_custom_call.1} parent=1 // pred_fallthru
      _
    // Predicated region
    $region10: #{tpu_custom_call.1} parent=1 // pred_check
      _
    $region11: #{tpu_custom_call.1} parent=1 // pred_check_branch
      %40 = sbr.rel (0) target = $region13
    $region12: #{tpu_custom_call.1} parent=1 // pred_region
      %42 = vsyncadd [#allocation6], 0
      %s44 = sshll.u32 %s2, 4
      %s45 = int_to_ptr.hbm [resolvable:$true] %s44
      %s46 = sshll.u32 [#allocation7], 4
      %s47 = int_to_ptr.vmem [resolvable:$true] %s46
      %49 = dma.hbm_to_vmem [thread:$0]  %s45, 64, %s47, [#allocation6]
    $region13: #{tpu_custom_call.1} parent=1 // pred_fallthru
      _
    // Predicated region
    $region14: #{tpu_custom_call.1} parent=1 // pred_check
      _
    $region15: #{tpu_custom_call.1} parent=1 // pred_check_branch
      %51 = sbr.rel (0) target = $region17
    $region16: #{tpu_custom_call.1} parent=1 // pred_region
      %53 = vsyncadd [#allocation9], 0
      %s55 = sshll.u32 %s3, 4
      %s56 = int_to_ptr.hbm [resolvable:$true] %s55
      %s57 = sshll.u32 [#allocation8], 4
      %s58 = int_to_ptr.vmem [resolvable:$true] %s57
      %60 = dma.hbm_to_vmem [thread:$0]  %s56, 64, %s58, [#allocation9]
    $region17: #{tpu_custom_call.1} parent=1 // pred_fallthru
      _
    // Predicated region
    $region18: #{tpu_custom_call.1} parent=1 // pred_check
      _
    $region19: #{tpu_custom_call.1} parent=1 // pred_check_branch
      %62 = sbr.rel (0) target = $region21
    $region20: #{tpu_custom_call.1} parent=1 // pred_region
      _
    $region21: #{tpu_custom_call.1} parent=1 // pred_fallthru
      _
    // Predicated region
    $region22: #{tpu_custom_call.1} parent=1 // pred_check
      _
    $region23: #{tpu_custom_call.1} parent=1 // pred_check_branch
      %64 = sbr.rel (0) target = $region25
    $region24: #{tpu_custom_call.1} parent=1 // pred_region
      %66 = dma.done [#allocation3], 32
    $region25: #{tpu_custom_call.1} parent=1 // pred_fallthru
      _
    // Predicated region
    $region26: #{tpu_custom_call.1} parent=1 // pred_check
      _
    $region27: #{tpu_custom_call.1} parent=1 // pred_check_branch
      %68 = sbr.rel (0) target = $region29
    $region28: #{tpu_custom_call.1} parent=1 // pred_region
      %70 = dma.done [#allocation6], 128
    $region29: #{tpu_custom_call.1} parent=1 // pred_fallthru
      _
    // Predicated region
    $region30: #{tpu_custom_call.1} parent=1 // pred_check
      _
    $region31: #{tpu_custom_call.1} parent=1 // pred_check_branch
      %72 = sbr.rel (0) target = $region33
    $region32: #{tpu_custom_call.1} parent=1 // pred_region
      %74 = dma.done [#allocation6], 64
    $region33: #{tpu_custom_call.1} parent=1 // pred_fallthru
      _
    // Predicated region
    $region34: #{tpu_custom_call.1} parent=1 // pred_check
      _
    $region35: #{tpu_custom_call.1} parent=1 // pred_check_branch
      %76 = sbr.rel (0) target = $region37
    $region36: #{tpu_custom_call.1} parent=1 // pred_region
      %78 = dma.done [#allocation9], 64
    $region37: #{tpu_custom_call.1} parent=1 // pred_fallthru
      _
    %v79 = vld [vmem:[#allocation2] sm:$0x3]
    %v80 = vld [vmem:[#allocation5] ss:$2 sm:$0xf]
    %82 = vset.pattern.permute.xlu0 0
    %83 = vperm.xlu0 %82, %v79
    %v84 = vpop.permute.xlu0 %83
    %v87 = vperm.slane %v80, 0
    %v88 = vperm.slane %v80, 1
    %v89 = vperm.slane %v80, 2
    %v90 = vperm.slane %v80, 3
    %v95 = vmul.f32 %v84, %v87
    %v96 = vmul.f32 %v84, %v88
    %v97 = vmul.f32 %v84, %v89
    %v98 = vmul.f32 %v84, %v90
    %s99 = scalar_lea.vmem [#allocation5], 1
    %v100 = vld [vmem:[%s99] ss:$2 sm:$0xf]
    %101 = vset.pattern.permute.xlu0 1
    %102 = vperm.xlu0 %101, %v79
    %v103 = vpop.permute.xlu0 %102
    %v106 = vperm.slane %v100, 0
    %v107 = vperm.slane %v100, 1
    %v108 = vperm.slane %v100, 2
    %v109 = vperm.slane %v100, 3
    %v114 = vmul.f32 %v103, %v106
    %v115 = vmul.f32 %v103, %v107
    %v116 = vmul.f32 %v103, %v108
    %v117 = vmul.f32 %v103, %v109
    %v118 = vadd.f32 %v95, %v114
    %v119 = vadd.f32 %v96, %v115
    %v120 = vadd.f32 %v97, %v116
    %v121 = vadd.f32 %v98, %v117
    %v122 = vld [vmem:[#allocation7] sm:$0xf]
    %v124 = vperm.slane %v122, 0
    %v125 = vperm.slane %v122, 1
    %v126 = vperm.slane %v122, 2
    %v127 = vperm.slane %v122, 3
    %v132 = vadd.f32 %v118, %v124
    %v133 = vadd.f32 %v119, %v125
    %v134 = vadd.f32 %v120, %v126
    %v135 = vadd.f32 %v121, %v127
    %v136 = vmax.f32 %v132, 0.0
    %v137 = vmax.f32 %v133, 0.0
    %v138 = vmax.f32 %v134, 0.0
    %v139 = vmax.f32 %v135, 0.0
    %v144 = vrot.slane %v137, 6
    %v145 = vrot.slane %v138, 4
    %v146 = vrot.slane %v139, 2
    %vm147 = vcmask 1041408
    %v148 = vsel %vm147, %v136, %v144
    %vm149 = vcmask 1045508
    %v150 = vsel %vm149, %v145, %v146
    %vm151 = vcmask 1043456
    %v152 = vsel %vm151, %v148, %v150
    %154 = vst [vmem:[#allocation10] sm:$0xff] %v152
    %v155 = vld [vmem:[#allocation8] ss:$2 sm:$0x3]
    %v157 = vperm.slane %v155, 0
    %v158 = vperm.slane %v155, 1
    %v161 = vmul.f32 %v84, %v157
    %v162 = vmul.f32 %v84, %v158
    %s163 = scalar_lea.vmem [#allocation8], 1
    %v164 = vld [vmem:[%s163] ss:$2 sm:$0x3]
    %v166 = vperm.slane %v164, 0
    %v167 = vperm.slane %v164, 1
    %v170 = vmul.f32 %v103, %v166
    %v171 = vmul.f32 %v103, %v167
    %v172 = vadd.f32 %v161, %v170
    %v173 = vadd.f32 %v162, %v171
    %v174 = vld [vmem:[%s4] sm:$0x3]
    %v176 = vperm.slane %v174, 0
    %v177 = vperm.slane %v174, 1
    %v180 = vadd.f32 %v172, %v176
    %v181 = vadd.f32 %v173, %v177
    %v182 = vmax.f32 %v180, 0.0
    %v183 = vmax.f32 %v181, 0.0
    %v186 = vrot.slane %v183, 6
    %v187 = vsel %vm147, %v182, %v186
    %vm189 = vcmask 388098
    %vm190 = vmor %vm189, %vm147
    %191 = vst.msk [vmem:[#allocation11] sm:$0xf] %vm190, %v187
    // Predicated region
    $region38: #{tpu_custom_call.1} parent=1 // pred_check
      _
    $region39: #{tpu_custom_call.1} parent=1 // pred_check_branch
      %193 = sbr.rel (0) target = $region41
    $region40: #{tpu_custom_call.1} parent=1 // pred_region
      %195 = vsyncadd [#allocation4], 0
      %s197 = sshll.u32 [#allocation10], 4
      %s198 = int_to_ptr.vmem [resolvable:$true] %s197
      %s199 = sshll.u32 %s5, 4
      %s200 = int_to_ptr.hbm [resolvable:$true] %s199
      %202 = dma.vmem_to_hbm [thread:$0]  %s198, 128, %s200, [#allocation4]
    $region41: #{tpu_custom_call.1} parent=1 // pred_fallthru
      _
    // Predicated region
    $region42: #{tpu_custom_call.1} parent=1 // pred_check
      _
    $region43: #{tpu_custom_call.1} parent=1 // pred_check_branch
      %204 = sbr.rel (0) target = $region45
    $region44: #{tpu_custom_call.1} parent=1 // pred_region
      %206 = vsyncadd [#allocation12], 0
      %s208 = sshll.u32 [#allocation11], 4
      %s209 = int_to_ptr.vmem [resolvable:$true] %s208
      %s210 = sshll.u32 %s6, 4
      %s211 = int_to_ptr.hbm [resolvable:$true] %s210
      %213 = dma.vmem_to_hbm [thread:$0]  %s209, 64, %s211, [#allocation12]
    $region45: #{tpu_custom_call.1} parent=1 // pred_fallthru
      _
    // Predicated region
    $region46: #{tpu_custom_call.1} parent=1 // pred_check
      _
    $region47: #{tpu_custom_call.1} parent=1 // pred_check_branch
      %215 = sbr.rel (0) target = $region49
    $region48: #{tpu_custom_call.1} parent=1 // pred_region
      %217 = dma.done [#allocation4], 128
    $region49: #{tpu_custom_call.1} parent=1 // pred_fallthru
      _
    // Predicated region
    $region50: #{tpu_custom_call.1} parent=1 // pred_check
      _
    $region51: #{tpu_custom_call.1} parent=1 // pred_check_branch
      %219 = sbr.rel (0) target = $region53
    $region52: #{tpu_custom_call.1} parent=1 // pred_region
      %221 = dma.done [#allocation12], 64
    $region53: #{tpu_custom_call.1} parent=1 // pred_fallthru
      _
    %222 = vsyncpa [#allocation3], 1
    %223 = vsyncpa [#allocation6], 1
    %224 = vsyncpa [#allocation9], 1
    %225 = vsyncpa [#allocation4], 1
    %226 = vsyncpa [#allocation12], 1

</llo_original>
